<compile_context>
chip_gen: v5e
topology: v5e:2x2
jax: 0.10.0
libtpu: 0.0.40
codegen_flags: <defaults>
</compile_context>

<pallas_src>
import functools

import jax
import jax.numpy as jnp
from jax.experimental import pallas as pl
from jax.experimental.pallas import tpu as pltpu


Z_PAD = 128  # lane-dense padded width for each of the mu / log_var heads


def _round_up(n, m):
    return ((n + m - 1) // m) * m


def _vae_label_kernel(x_ref, w1_ref, b1_ref, wf_ref, bf_ref, eps_ref, z_ref,
                      *, zp):
    # Encoder hidden layer: h = relu(x @ W1 + b1)    (MXU + VPU)
    h = jnp.dot(x_ref[...], w1_ref[...],
                preferred_element_type=jnp.float32) + b1_ref[...]
    h = jnp.maximum(h, 0.0)

    # Fused mu / log_var heads: one [TB, 2*zp] matmul on the MXU.
    m = jnp.dot(h, wf_ref[...],
                preferred_element_type=jnp.float32) + bf_ref[...]
    mu = m[:, :zp]          # 128-lane-aligned slice: mask-free
    log_var = m[:, zp:]     # 128-lane-aligned slice: mask-free

    # Reparameterization: z = mu + eps * exp(0.75 * log_var)   (exp -> EUP)
    z_ref[...] = mu + eps_ref[...] * jnp.exp(0.75 * log_var)


def prepare_params(w1, b1, w2, b2, w3, b3):
    """One-time (init-time) fusion + lane-padding of the two z-heads.

    Weights are stored [in_dim, out_dim] so the kernel computes x @ W + b
    directly on the MXU.
    """
    hdim = w1.shape[1]
    zdim = w2.shape[1]

    w2p = jnp.zeros((hdim, Z_PAD), jnp.float32).at[:, :zdim].set(w2)
    w3p = jnp.zeros((hdim, Z_PAD), jnp.float32).at[:, :zdim].set(w3)
    wf = jnp.concatenate([w2p, w3p], axis=1)                    # [hdim, 2*Z_PAD]

    b2p = jnp.zeros((1, Z_PAD), jnp.float32).at[:, :zdim].set(b2.reshape(1, zdim))
    b3p = jnp.zeros((1, Z_PAD), jnp.float32).at[:, :zdim].set(b3.reshape(1, zdim))
    bf = jnp.concatenate([b2p, b3p], axis=1)                    # [1, 2*Z_PAD]

    return dict(w1=w1, b1=b1.reshape(1, hdim), wf=wf, bf=bf, zdim=zdim)


@functools.partial(jax.jit, static_argnames=("zdim",))
def _forward_fused(x_labels, eps, w1, b1, wf, bf, *, zdim):
    B, xdim = x_labels.shape
    hdim = w1.shape[1]

    # Batch tiling: sublane-aligned tile, capped at 512 rows.
    TB = min(512, _round_up(B, 8))
    B_pad = _round_up(B, TB)

    x_p = jnp.zeros((B_pad, xdim), jnp.float32).at[:B, :].set(x_labels)
    eps_p = jnp.zeros((B_pad, Z_PAD), jnp.float32).at[:B, :zdim].set(eps)

    grid = (B_pad // TB,)

    z_pad = pl.pallas_call(
        functools.partial(_vae_label_kernel, zp=Z_PAD),
        out_shape=jax.ShapeDtypeStruct((B_pad, Z_PAD), jnp.float32),
        grid=grid,
        in_specs=[
            pl.BlockSpec((TB, xdim), lambda i: (i, 0)),         # x tile (streamed)
            pl.BlockSpec((xdim, hdim), lambda i: (0, 0)),       # W1 (resident)
            pl.BlockSpec((1, hdim), lambda i: (0, 0)),          # b1 (resident)
            pl.BlockSpec((hdim, 2 * Z_PAD), lambda i: (0, 0)),  # fused head W
            pl.BlockSpec((1, 2 * Z_PAD), lambda i: (0, 0)),     # fused head b
            pl.BlockSpec((TB, Z_PAD), lambda i: (i, 0)),        # eps tile
        ],
        out_specs=pl.BlockSpec((TB, Z_PAD), lambda i: (i, 0)),  # lane-dense z
        compiler_params=pltpu.CompilerParams(
            dimension_semantics=("parallel",)),
    )(x_p, w1, b1, wf, bf, eps_p)

    return z_pad[:B, :zdim]


def vae_location_labels_forward(x_labels, params, eps):
    """VAElocationlabels forward (z sample) using the fused Pallas kernel."""
    return _forward_fused(x_labels, eps, params["w1"], params["b1"],
                          params["wf"], params["bf"], zdim=params["zdim"])


def init_params(key, xlabel_dim, hlabel_dim, zlabel_dim):
    """Deterministic synthetic parameters (PyTorch Linear-like uniform init)."""
    ks = jax.random.split(key, 6)

    def linear(kw, kb, fan_in, fan_out):
        bound = 1.0 / jnp.sqrt(fan_in)
        # stored as [in, out] (transposed relative to torch's [out, in])
        w = jax.random.uniform(kw, (fan_in, fan_out), jnp.float32, -bound, bound)
        b = jax.random.uniform(kb, (1, fan_out), jnp.float32, -bound, bound)
        return w, b

    w1, b1 = linear(ks[0], ks[1], xlabel_dim, hlabel_dim)
    w2, b2 = linear(ks[2], ks[3], hlabel_dim, zlabel_dim)
    w3, b3 = linear(ks[4], ks[5], hlabel_dim, zlabel_dim)
    return w1, b1, w2, b2, w3, b3


if __name__ == "__main__":
    # Small shapes consistent with the module's forward pass.
    B, XLABEL_DIM, HLABEL_DIM, ZLABEL_DIM = 8, 16, 32, 8

    key = jax.random.PRNGKey(0)
    k_x, k_eps, k_params = jax.random.split(key, 3)

    x_labels = jax.random.normal(k_x, (B, XLABEL_DIM), jnp.float32)
    eps = jax.random.normal(k_eps, (B, ZLABEL_DIM), jnp.float32)
    w1, b1, w2, b2, w3, b3 = init_params(k_params, XLABEL_DIM, HLABEL_DIM,
                                         ZLABEL_DIM)

    # One-time head fusion / padding (init-time cost, not per forward call).
    params = prepare_params(w1, b1, w2, b2, w3, b3)

    z = vae_location_labels_forward(x_labels, params, eps)
    jax.block_until_ready(z)

    # Pure-JAX reference check of the same math.
    h_ref = jnp.maximum(x_labels @ w1 + b1, 0.0)
    mu_ref = h_ref @ w2 + b2
    log_var_ref = h_ref @ w3 + b3
    z_ref = mu_ref + eps * jnp.exp(0.75 * log_var_ref)
    assert z.shape == z_ref.shape, "shape mismatch vs reference"
    assert jnp.allclose(z, z_ref, atol=1e-5, rtol=1e-5), "mismatch vs reference"

    print("KERNEL_OK")
</pallas_src>

<mosaic_0001>
module attributes {stable_mosaic.version = 11 : i64} {
  func.func @_vae_label_kernel(%arg0: i32, %arg1: memref<8x16xf32, #tpu.memory_space<vmem>>, %arg2: memref<16x32xf32, #tpu.memory_space<vmem>>, %arg3: memref<1x32xf32, #tpu.memory_space<vmem>>, %arg4: memref<32x256xf32, #tpu.memory_space<vmem>>, %arg5: memref<1x256xf32, #tpu.memory_space<vmem>>, %arg6: memref<8x128xf32, #tpu.memory_space<vmem>>, %arg7: memref<8x128xf32, #tpu.memory_space<vmem>>) attributes {dimension_semantics = [#tpu.dimension_semantics<parallel>], iteration_bounds = array<i64: 1>, scalar_prefetch = 0 : i64, scratch_operands = 0 : i64, tpu.core_type = #tpu.core_type<tc>, window_params = [{transform_indices = @transform_0, window_bounds = array<i64: 8, 16>}, {pipeline_mode = #tpu.pipeline_mode<synchronous>, transform_indices = @transform_1, window_bounds = array<i64: 16, 32>}, {pipeline_mode = #tpu.pipeline_mode<synchronous>, transform_indices = @transform_2, window_bounds = array<i64: 1, 32>}, {pipeline_mode = #tpu.pipeline_mode<synchronous>, transform_indices = @transform_3, window_bounds = array<i64: 32, 256>}, {pipeline_mode = #tpu.pipeline_mode<synchronous>, transform_indices = @transform_4, window_bounds = array<i64: 1, 256>}, {transform_indices = @transform_5, window_bounds = array<i64: 8, 128>}, {transform_indices = @transform_6, window_bounds = array<i64: 8, 128>}]} {
    %c0 = arith.constant 0 : index
    %c0_0 = arith.constant 0 : index
    %0 = vector.load %arg1[%c0, %c0_0] : memref<8x16xf32, #tpu.memory_space<vmem>>, vector<8x16xf32>
    %c0_1 = arith.constant 0 : index
    %c0_2 = arith.constant 0 : index
    %1 = vector.load %arg2[%c0_1, %c0_2] : memref<16x32xf32, #tpu.memory_space<vmem>>, vector<16x32xf32>
    %cst = arith.constant dense<0.000000e+00> : vector<8x32xf32>
    %2 = tpu.matmul %0, %1, %cst {dimension_numbers = #tpu.dot_dimension_numbers<[1], [0], [0], [1], [0, 0, 1, 1], [], []>} : vector<8x16xf32>, vector<16x32xf32>, vector<8x32xf32> -> vector<8x32xf32>
    %c0_3 = arith.constant 0 : index
    %c0_4 = arith.constant 0 : index
    %3 = vector.load %arg3[%c0_3, %c0_4] : memref<1x32xf32, #tpu.memory_space<vmem>>, vector<1x32xf32>
    %4 = vector.broadcast %3 : vector<1x32xf32> to vector<8x32xf32>
    %5 = arith.addf %2, %4 : vector<8x32xf32>
    %cst_5 = arith.constant 0.000000e+00 : f32
    %6 = vector.broadcast %cst_5 : f32 to vector<8x32xf32>
    %7 = arith.maximumf %5, %6 : vector<8x32xf32>
    %c0_6 = arith.constant 0 : index
    %c0_7 = arith.constant 0 : index
    %8 = vector.load %arg4[%c0_6, %c0_7] : memref<32x256xf32, #tpu.memory_space<vmem>>, vector<32x256xf32>
    %cst_8 = arith.constant dense<0.000000e+00> : vector<8x256xf32>
    %9 = tpu.matmul %7, %8, %cst_8 {dimension_numbers = #tpu.dot_dimension_numbers<[1], [0], [0], [1], [0, 0, 1, 1], [], []>} : vector<8x32xf32>, vector<32x256xf32>, vector<8x256xf32> -> vector<8x256xf32>
    %c0_9 = arith.constant 0 : index
    %c0_10 = arith.constant 0 : index
    %10 = vector.load %arg5[%c0_9, %c0_10] : memref<1x256xf32, #tpu.memory_space<vmem>>, vector<1x256xf32>
    %11 = vector.broadcast %10 : vector<1x256xf32> to vector<8x256xf32>
    %12 = arith.addf %9, %11 : vector<8x256xf32>
    %13 = vector.extract_strided_slice %12 {offsets = [0, 0], sizes = [8, 128], strides = [1, 1]} : vector<8x256xf32> to vector<8x128xf32>
    %14 = vector.extract_strided_slice %12 {offsets = [0, 128], sizes = [8, 128], strides = [1, 1]} : vector<8x256xf32> to vector<8x128xf32>
    %c0_11 = arith.constant 0 : index
    %c0_12 = arith.constant 0 : index
    %15 = vector.load %arg6[%c0_11, %c0_12] : memref<8x128xf32, #tpu.memory_space<vmem>>, vector<8x128xf32>
    %cst_13 = arith.constant 7.500000e-01 : f32
    %16 = vector.broadcast %cst_13 : f32 to vector<8x128xf32>
    %17 = arith.mulf %16, %14 : vector<8x128xf32>
    %18 = math.exp %17 : vector<8x128xf32>
    %19 = arith.mulf %15, %18 : vector<8x128xf32>
    %20 = arith.addf %13, %19 : vector<8x128xf32>
    %c0_14 = arith.constant 0 : index
    %c0_15 = arith.constant 0 : index
    %21 = vector.load %arg7[%c0_14, %c0_15] : memref<8x128xf32, #tpu.memory_space<vmem>>, vector<8x128xf32>
    tpu.vector_store %arg7[%c0_14, %c0_15], %20 {strides = array<i32>} : memref<8x128xf32, #tpu.memory_space<vmem>>, vector<8x128xf32>,
    return
  }
  func.func @transform_0(%arg0: i32) -> (i32, i32) {
    %c0_i32 = arith.constant 0 : i32
    %c0_i32_0 = arith.constant 0 : i32
    return %arg0, %c0_i32 : i32, i32
  }
  func.func @transform_1(%arg0: i32) -> (i32, i32) {
    %c0_i32 = arith.constant 0 : i32
    %c0_i32_0 = arith.constant 0 : i32
    %c0_i32_1 = arith.constant 0 : i32
    return %c0_i32, %c0_i32_0 : i32, i32
  }
  func.func @transform_2(%arg0: i32) -> (i32, i32) {
    %c0_i32 = arith.constant 0 : i32
    %c0_i32_0 = arith.constant 0 : i32
    %c0_i32_1 = arith.constant 0 : i32
    return %c0_i32, %c0_i32_0 : i32, i32
  }
  func.func @transform_3(%arg0: i32) -> (i32, i32) {
    %c0_i32 = arith.constant 0 : i32
    %c0_i32_0 = arith.constant 0 : i32
    %c0_i32_1 = arith.constant 0 : i32
    return %c0_i32, %c0_i32_0 : i32, i32
  }
  func.func @transform_4(%arg0: i32) -> (i32, i32) {
    %c0_i32 = arith.constant 0 : i32
    %c0_i32_0 = arith.constant 0 : i32
    %c0_i32_1 = arith.constant 0 : i32
    return %c0_i32, %c0_i32_0 : i32, i32
  }
  func.func @transform_5(%arg0: i32) -> (i32, i32) {
    %c0_i32 = arith.constant 0 : i32
    %c0_i32_0 = arith.constant 0 : i32
    return %arg0, %c0_i32 : i32, i32
  }
  func.func @transform_6(%arg0: i32) -> (i32, i32) {
    %c0_i32 = arith.constant 0 : i32
    %c0_i32_0 = arith.constant 0 : i32
    return %arg0, %c0_i32 : i32, i32
  }
}

</mosaic_0001>

<llo_original>
// kernel: _forward_fused.1
$region0: #{_forward_fused.1}
  #allocation0 [shape = 'u32[]', space=smem, size = 0x4, offset = 0x4, fixed_abs, tag = 'smem constant byte address 0x4 - core index']
  #allocation1 [shape = 'u32[72,128]{1,0:T(1,128)}', space=vmem, size = 0x9000, scoped, tag = 'internal scratch']
  %s0 = inlined_call_operand.vmem [shape: f32[8,16], index: 0, kind: input, shape index: {}]
  %s1 = inlined_call_operand.vmem [shape: f32[16,32], index: 1, kind: input, shape index: {}]
  %s2 = inlined_call_operand.vmem [shape: f32[1,32], index: 2, kind: input, shape index: {}]
  %s3 = inlined_call_operand.hbm [shape: f32[32,256], index: 3, kind: input, shape index: {}]
  %s4 = inlined_call_operand.vmem [shape: f32[1,256], index: 4, kind: input, shape index: {}]
  %s5 = inlined_call_operand.vmem [shape: f32[8,128], index: 5, kind: input, shape index: {}]
  %s6 = inlined_call_operand.hbm [shape: f32[8,128], index: 6, kind: output, shape index: {}]
  %s7 = sld [smem:[#allocation0]]
  $region38: #{_forward_fused.1} parent=0
    _
  %s9 = ssub.s32 1, %s7
  %s10 = scalar_select 0, %s9, %s7
  $region1: #{_forward_fused.1} parent=0
    #allocation2 [shape = 'u8[32768]{0}', space=vmem, size = 0x8000, scoped, tag = 'input window, operand 3, single buffered']
    #allocation3 [shape = 's32[1]{0}', space=sflag, size = 0x4, scoped, tag = 'scoped memory for _forward_fused.1']
    #allocation4 [shape = 's32[1]{0}', space=sflag, size = 0x4, scoped, tag = 'scoped memory for _forward_fused.1']
    #allocation5 [shape = 'u8[4096]{0}', space=vmem, size = 0x1000, scoped, tag = 'output window, operand 0, single buffered']
    %11 = vsyncpa [#allocation3], 0
    %12 = vsyncpa [#allocation4], 0
    // Predicated region
    $region2: #{_forward_fused.1} parent=1 // pred_check
      _
    $region3: #{_forward_fused.1} parent=1 // pred_check_branch
      %14 = sbr.rel (0) target = $region5
    $region4: #{_forward_fused.1} parent=1 // pred_region
      _
    $region5: #{_forward_fused.1} parent=1 // pred_fallthru
      _
    // Predicated region
    $region6: #{_forward_fused.1} parent=1 // pred_check
      _
    $region7: #{_forward_fused.1} parent=1 // pred_check_branch
      %16 = sbr.rel (0) target = $region9
    $region8: #{_forward_fused.1} parent=1 // pred_region
      _
    $region9: #{_forward_fused.1} parent=1 // pred_fallthru
      _
    // Predicated region
    $region10: #{_forward_fused.1} parent=1 // pred_check
      _
    $region11: #{_forward_fused.1} parent=1 // pred_check_branch
      %18 = sbr.rel (0) target = $region13
    $region12: #{_forward_fused.1} parent=1 // pred_region
      _
    $region13: #{_forward_fused.1} parent=1 // pred_fallthru
      _
    // Predicated region
    $region14: #{_forward_fused.1} parent=1 // pred_check
      _
    $region15: #{_forward_fused.1} parent=1 // pred_check_branch
      %20 = sbr.rel (0) target = $region17
    $region16: #{_forward_fused.1} parent=1 // pred_region
      %22 = vsyncadd [#allocation3], 0
      %s23 = sshll.u32 %s3, 4
      %s24 = int_to_ptr.hbm [resolvable:$true] %s23
      %s25 = sshll.u32 [#allocation2], 4
      %s26 = int_to_ptr.vmem [resolvable:$true] %s25
      %31 = dma.hbm_to_vmem [thread:$0]  %s24, 1024, %s26, [#allocation3], 256, 256, 16
    $region17: #{_forward_fused.1} parent=1 // pred_fallthru
      _
    // Predicated region
    $region18: #{_forward_fused.1} parent=1 // pred_check
      _
    $region19: #{_forward_fused.1} parent=1 // pred_check_branch
      %33 = sbr.rel (0) target = $region21
    $region20: #{_forward_fused.1} parent=1 // pred_region
      _
    $region21: #{_forward_fused.1} parent=1 // pred_fallthru
      _
    // Predicated region
    $region22: #{_forward_fused.1} parent=1 // pred_check
      _
    $region23: #{_forward_fused.1} parent=1 // pred_check_branch
      %35 = sbr.rel (0) target = $region25
    $region24: #{_forward_fused.1} parent=1 // pred_region
      _
    $region25: #{_forward_fused.1} parent=1 // pred_fallthru
      _
    // Predicated region
    $region26: #{_forward_fused.1} parent=1 // pred_check
      _
    $region27: #{_forward_fused.1} parent=1 // pred_check_branch
      %37 = sbr.rel (0) target = $region29
    $region28: #{_forward_fused.1} parent=1 // pred_region
      %39 = dma.done [#allocation3], 1024
    $region29: #{_forward_fused.1} parent=1 // pred_fallthru
      _
    %v40 = vld [vmem:[%s0] sm:$0xff]
    %v41 = vld [vmem:[%s1] sm:$0xff]
    %v42 = vld [vmem:[%s1 + $0x8] sm:$0xff]
    %v43 = vld [vmem:[%s2] sm:$0x1]
    %v45 = vperm.slane %v43, 0
    %vm47 = vcmask 130048
    %v49 = vsel %vm47, %v40, 0
    %51 = vmatpush.msra.mxu0 0.0
    %52 = vmatpush.msra.mxu0 0.0
    %53 = vmatpush.msra.mxu0 0.0
    %54 = vmatpush.msra.mxu0 0.0
    %55 = vmatpush.msra.mxu0 0.0
    %56 = vmatpush.msra.mxu0 0.0
    %57 = vmatpush.msra.mxu0 0.0
    %58 = vmatpush.msra.mxu0 0.0
    %59 = vmatpush.msra.mxu0 0.0
    %60 = vmatpush.msra.mxu0 0.0
    %61 = vmatpush.msra.mxu0 0.0
    %62 = vmatpush.msra.mxu0 0.0
    %63 = vmatpush.msra.mxu0 0.0
    %64 = vmatpush.msra.mxu0 0.0
    %65 = vmatpush.msra.mxu0 %v42
    %66 = vmatpush.msra.mxu0 %v41
    %67 = vmatmul.f32.gmra.mxu0 %v49
    %v68 = vpop.f32.mrf.mxu0
    %v69 = vadd.f32 %v45, %v68
    %70 = vdwg.mxu0
    %v71 = vmax.f32 %v69, 0.0
    %v72 = vld [vmem:[#allocation2] sm:$0xff]
    %v73 = vld [vmem:[#allocation2 + $0x8] sm:$0xff]
    %v74 = vld [vmem:[#allocation2 + $0x10] sm:$0xff]
    %v75 = vld [vmem:[#allocation2 + $0x18] sm:$0xff]
    %v76 = vld [vmem:[#allocation2 + $0x20] sm:$0xff]
    %v77 = vld [vmem:[#allocation2 + $0x28] sm:$0xff]
    %v78 = vld [vmem:[#allocation2 + $0x30] sm:$0xff]
    %v79 = vld [vmem:[#allocation2 + $0x38] sm:$0xff]
    %v80 = vld [vmem:[%s4] sm:$0x3]
    %v82 = vperm.slane %v80, 0
    %v83 = vperm.slane %v80, 1
    %vm86 = vcmask 261120
    %v88 = vsel %vm86, %v71, 0
    %90 = vmatpush.msra.mxu0 0.0
    %91 = vmatpush.msra.mxu0 0.0
    %92 = vmatpush.msra.mxu0 0.0
    %93 = vmatpush.msra.mxu0 0.0
    %94 = vmatpush.msra.mxu0 0.0
    %95 = vmatpush.msra.mxu0 0.0
    %96 = vmatpush.msra.mxu0 0.0
    %97 = vmatpush.msra.mxu0 0.0
    %98 = vmatpush.msra.mxu0 0.0
    %99 = vmatpush.msra.mxu0 0.0
    %100 = vmatpush.msra.mxu0 0.0
    %101 = vmatpush.msra.mxu0 0.0
    %102 = vmatpush.msra.mxu0 %v78
    %103 = vmatpush.msra.mxu0 %v76
    %104 = vmatpush.msra.mxu0 %v74
    %105 = vmatpush.msra.mxu0 %v72
    %106 = vmatmul.f32.gmra.mxu0 %v88
    %v107 = vpop.f32.mrf.mxu0
    %v108 = vadd.f32 %v82, %v107
    %109 = vdwg.mxu0
    %110 = vmatpush.msra.mxu0 0.0
    %111 = vmatpush.msra.mxu0 0.0
    %112 = vmatpush.msra.mxu0 0.0
    %113 = vmatpush.msra.mxu0 0.0
    %114 = vmatpush.msra.mxu0 0.0
    %115 = vmatpush.msra.mxu0 0.0
    %116 = vmatpush.msra.mxu0 0.0
    %117 = vmatpush.msra.mxu0 0.0
    %118 = vmatpush.msra.mxu0 0.0
    %119 = vmatpush.msra.mxu0 0.0
    %120 = vmatpush.msra.mxu0 0.0
    %121 = vmatpush.msra.mxu0 0.0
    %122 = vmatpush.msra.mxu0 %v79
    %123 = vmatpush.msra.mxu0 %v77
    %124 = vmatpush.msra.mxu0 %v75
    %125 = vmatpush.msra.mxu0 %v73
    %126 = vmatmul.f32.gmra.mxu0 %v88
    %v127 = vpop.f32.mrf.mxu0
    %v128 = vadd.f32 %v83, %v127
    %129 = vdwg.mxu0
    %v130 = vld [vmem:[%s5] sm:$0xff]
    %v131 = vmul.f32 %v128, 0.75
    %v132 = vmul.f32 %v131, 1.442695
    %v133 = vpow.pop %v132
    %v134 = vmul.f32 %v130, %v133
    %v135 = vadd.f32 %v108, %v134
    %136 = vst [vmem:[#allocation5] sm:$0xff] %v135
    // Predicated region
    $region30: #{_forward_fused.1} parent=1 // pred_check
      _
    $region31: #{_forward_fused.1} parent=1 // pred_check_branch
      %138 = sbr.rel (0) target = $region33
    $region32: #{_forward_fused.1} parent=1 // pred_region
      %140 = vsyncadd [#allocation4], 0
      %s142 = sshll.u32 [#allocation5], 4
      %s143 = int_to_ptr.vmem [resolvable:$true] %s142
      %s144 = sshll.u32 %s6, 4
      %s145 = int_to_ptr.hbm [resolvable:$true] %s144
      %147 = dma.vmem_to_hbm [thread:$0]  %s143, 128, %s145, [#allocation4]
    $region33: #{_forward_fused.1} parent=1 // pred_fallthru
      _
    // Predicated region
    $region34: #{_forward_fused.1} parent=1 // pred_check
      _
    $region35: #{_forward_fused.1} parent=1 // pred_check_branch
      %149 = sbr.rel (0) target = $region37
    $region36: #{_forward_fused.1} parent=1 // pred_region
      %151 = dma.done [#allocation4], 128
    $region37: #{_forward_fused.1} parent=1 // pred_fallthru
      _
    %152 = vsyncpa [#allocation3], 1
    %153 = vsyncpa [#allocation4], 1

</llo_original>
